<compile_context>
chip_gen: v7x
topology: tpu7x:2x2x1
jax: 0.10.0
libtpu: 0.0.40
codegen_flags: <defaults>
</compile_context>

<pallas_src>
import functools

import jax
import jax.numpy as jnp
from jax.experimental import pallas as pl
from jax.experimental.pallas import tpu as pltpu


LANE = 128      # lane width; every DQN fan_out here is <= 128
SUBLANE = 8     # f32 sublane height
MAX_TB = 1024   # max batch rows per grid step (review: 512-2048 all fit VMEM)


def _round_up(n, m):
    return ((n + m - 1) // m) * m


def _choose_tb(batch):
    """Batch-tile size: exact single block for tiny (RL act-step) batches,
    otherwise a sublane-multiple tile giving >= 2 grid steps (v7x megacore)."""
    if batch <= 2 * SUBLANE:
        return batch                                   # block == full array dims
    half = -(-batch // 2)                              # ceil(batch / 2)
    return min(_round_up(half, SUBLANE), MAX_TB)


def _make_dqn_kernel(num_layers, in_features, out_features, kpad):
    """One batch tile.

    Refs: x [TB, in_features], w_slab [L, KPAD, 128], b_slab [L, 1, 128],
    out [TB, out_features].  ReLU after every layer except the last
    (matches DQN.forward).
    """

    def kernel(x_ref, w_ref, b_ref, out_ref):
        t = x_ref[...]                                 # [TB, in_features]
        for layer in range(num_layers):
            k = in_features if layer == 0 else kpad
            # Padded activation lanes / slab rows beyond the real fan_in are
            # zero, so slicing to k columns is exact.
            t = jnp.dot(t[:, :k], w_ref[layer][:k, :],
                        preferred_element_type=jnp.float32)
            t = t + b_ref[layer]                       # (1, LANE) broadcasts
            if layer != num_layers - 1:
                t = jnp.maximum(t, 0.0)                # ReLU on hidden layers only
        out_ref[...] = t[:, :out_features].astype(out_ref.dtype)

    return kernel


def init_dqn_params(key, inputs, hidden, outputs):
    """PyTorch nn.Linear-style init (uniform +-1/sqrt(fan_in)).

    Returns a list of (W [in, out], b [out]) in layer order fc1..fcN, out.
    """
    dims = [inputs] + list(hidden) + [outputs]
    params = []
    for i in range(len(dims) - 1):
        fan_in, fan_out = dims[i], dims[i + 1]
        key, kw, kb = jax.random.split(key, 3)
        bound = 1.0 / jnp.sqrt(jnp.float32(fan_in))
        w = jax.random.uniform(kw, (fan_in, fan_out), jnp.float32, -bound, bound)
        b = jax.random.uniform(kb, (fan_out,), jnp.float32, -bound, bound)
        params.append((w, b))
    return params


def pack_params(params):
    """Pack per-layer (W, b) into one zero-padded weight slab [L, KPAD, 128]
    and one bias slab [L, 1, 128] (single HBM->VMEM DMA each)."""
    num_layers = len(params)
    max_fan_in = max(w.shape[0] for w, _ in params)
    kpad = _round_up(max_fan_in, SUBLANE)
    w_slab = jnp.zeros((num_layers, kpad, LANE), jnp.float32)
    b_slab = jnp.zeros((num_layers, 1, LANE), jnp.float32)
    for l, (w, b) in enumerate(params):
        fan_in, fan_out = w.shape
        assert fan_in <= kpad and fan_out <= LANE, "feature dims must fit one lane tile"
        w_slab = w_slab.at[l, :fan_in, :fan_out].set(w)
        b_slab = b_slab.at[l, 0, :fan_out].set(b)
    return w_slab, b_slab


@functools.partial(jax.jit, static_argnames=("out_features",))
def dqn_forward(x, w_slab, b_slab, out_features):
    """x: [batch, in_features] f32; w_slab: [L, KPAD, 128]; b_slab: [L, 1, 128]."""
    batch, in_features = x.shape
    num_layers, kpad, lane = w_slab.shape

    tb = _choose_tb(batch)
    grid = (pl.cdiv(batch, tb),)

    kernel = _make_dqn_kernel(num_layers, in_features, out_features, kpad)
    out = pl.pallas_call(
        kernel,
        out_shape=jax.ShapeDtypeStruct((batch, out_features), jnp.float32),
        grid_spec=pltpu.PrefetchScalarGridSpec(
            num_scalar_prefetch=0,
            grid=grid,
            in_specs=[
                # True-width input block (batch-tiled).
                pl.BlockSpec((tb, in_features), lambda i: (i, 0)),
                # Weights/biases: grid-invariant block -> fetched once, resident.
                pl.BlockSpec((num_layers, kpad, lane), lambda i: (0, 0, 0)),
                pl.BlockSpec((num_layers, 1, lane), lambda i: (0, 0, 0)),
            ],
            out_specs=pl.BlockSpec((tb, out_features), lambda i: (i, 0)),
        ),
        compiler_params=pltpu.CompilerParams(
            dimension_semantics=("parallel",),
        ),
    )(x, w_slab, b_slab)

    # TODO(synk): for an RL loop calling this per environment step, batch many
    # states per call (or keep the act/learn loop inside one pallas_call, or use
    # cross-call weight residency) to amortize the per-launch fixed cost; at
    # batch~1-2 launch + DMA latency dominates and plain XLA is comparable.
    return out


def dqn_reference(x, params):
    """Plain-JAX reference (unpadded) for correctness checking."""
    t = x
    for i, (w, b) in enumerate(params):
        t = t @ w + b
        if i != len(params) - 1:
            t = jnp.maximum(t, 0.0)
    return t


if __name__ == "__main__":
    # DQN(inputs=8, hidden=[32, 32], outputs=4) -> fc1, fc2, out
    inputs, hidden, outputs = 8, [32, 32], 4

    key = jax.random.PRNGKey(0)
    key, kx, kx2 = jax.random.split(key, 3)
    params = init_dqn_params(key, inputs, hidden, outputs)
    w_slab, b_slab = pack_params(params)

    # Small (RL act-step style) batch: single exact block, no padding launches.
    batch = 2
    x = jax.random.normal(kx, (batch, inputs), jnp.float32)
    y = jax.block_until_ready(dqn_forward(x, w_slab, b_slab, outputs))
    y_ref = dqn_reference(x, params)
    assert y.shape == (batch, outputs)
    assert jnp.allclose(y, y_ref, atol=1e-5, rtol=1e-5), "small-batch mismatch vs reference"

    # Larger batch: exercises the 2-step parallel grid (both TCs on v7x).
    batch2 = 304
    x2 = jax.random.normal(kx2, (batch2, inputs), jnp.float32)
    y2 = jax.block_until_ready(dqn_forward(x2, w_slab, b_slab, outputs))
    y2_ref = dqn_reference(x2, params)
    assert y2.shape == (batch2, outputs)
    assert jnp.allclose(y2, y2_ref, atol=1e-5, rtol=1e-5), "large-batch mismatch vs reference"

    print("KERNEL_OK")
</pallas_src>

<mosaic_0001>
module attributes {stable_mosaic.version = 11 : i64} {
  func.func @kernel(%arg0: i32, %arg1: memref<2x8xf32, #tpu.memory_space<vmem>>, %arg2: memref<3x32x128xf32, #tpu.memory_space<vmem>>, %arg3: memref<3x1x128xf32, #tpu.memory_space<vmem>>, %arg4: memref<2x4xf32, #tpu.memory_space<vmem>>) attributes {dimension_semantics = [#tpu.dimension_semantics<parallel>], iteration_bounds = array<i64: 1>, scalar_prefetch = 0 : i64, scratch_operands = 0 : i64, tpu.core_type = #tpu.core_type<tc>, window_params = [{transform_indices = @transform_0, window_bounds = array<i64: 2, 8>}, {pipeline_mode = #tpu.pipeline_mode<synchronous>, transform_indices = @transform_1, window_bounds = array<i64: 3, 32, 128>}, {pipeline_mode = #tpu.pipeline_mode<synchronous>, transform_indices = @transform_2, window_bounds = array<i64: 3, 1, 128>}, {transform_indices = @transform_3, window_bounds = array<i64: 2, 4>}]} {
    %c0 = arith.constant 0 : index
    %c0_0 = arith.constant 0 : index
    %0 = vector.load %arg1[%c0, %c0_0] : memref<2x8xf32, #tpu.memory_space<vmem>>, vector<2x8xf32>
    %c0_1 = arith.constant 0 : index
    %c0_2 = arith.constant 0 : index
    %c0_3 = arith.constant 0 : index
    %1 = vector.load %arg2[%c0_1, %c0_2, %c0_3] : memref<3x32x128xf32, #tpu.memory_space<vmem>>, vector<1x32x128xf32>
    %2 = vector.shape_cast %1 : vector<1x32x128xf32> to vector<32x128xf32>
    %3 = vector.extract_strided_slice %2 {offsets = [0, 0], sizes = [8, 128], strides = [1, 1]} : vector<32x128xf32> to vector<8x128xf32>
    %cst = arith.constant dense<0.000000e+00> : vector<2x128xf32>
    %4 = tpu.matmul %0, %3, %cst {dimension_numbers = #tpu.dot_dimension_numbers<[1], [0], [0], [1], [0, 0, 1, 1], [], []>} : vector<2x8xf32>, vector<8x128xf32>, vector<2x128xf32> -> vector<2x128xf32>
    %c0_4 = arith.constant 0 : index
    %c0_5 = arith.constant 0 : index
    %c0_6 = arith.constant 0 : index
    %5 = vector.load %arg3[%c0_4, %c0_5, %c0_6] : memref<3x1x128xf32, #tpu.memory_space<vmem>>, vector<1x1x128xf32>
    %6 = vector.shape_cast %5 : vector<1x1x128xf32> to vector<1x128xf32>
    %7 = vector.broadcast %6 : vector<1x128xf32> to vector<2x128xf32>
    %8 = arith.addf %4, %7 : vector<2x128xf32>
    %cst_7 = arith.constant 0.000000e+00 : f32
    %9 = vector.broadcast %cst_7 : f32 to vector<2x128xf32>
    %10 = arith.maximumf %8, %9 : vector<2x128xf32>
    %11 = vector.extract_strided_slice %10 {offsets = [0, 0], sizes = [2, 32], strides = [1, 1]} : vector<2x128xf32> to vector<2x32xf32>
    %c1 = arith.constant 1 : index
    %c0_8 = arith.constant 0 : index
    %c0_9 = arith.constant 0 : index
    %12 = vector.load %arg2[%c1, %c0_8, %c0_9] : memref<3x32x128xf32, #tpu.memory_space<vmem>>, vector<1x32x128xf32>
    %13 = vector.shape_cast %12 : vector<1x32x128xf32> to vector<32x128xf32>
    %cst_10 = arith.constant dense<0.000000e+00> : vector<2x128xf32>
    %14 = tpu.matmul %11, %13, %cst_10 {dimension_numbers = #tpu.dot_dimension_numbers<[1], [0], [0], [1], [0, 0, 1, 1], [], []>} : vector<2x32xf32>, vector<32x128xf32>, vector<2x128xf32> -> vector<2x128xf32>
    %c1_11 = arith.constant 1 : index
    %c0_12 = arith.constant 0 : index
    %c0_13 = arith.constant 0 : index
    %15 = vector.load %arg3[%c1_11, %c0_12, %c0_13] : memref<3x1x128xf32, #tpu.memory_space<vmem>>, vector<1x1x128xf32>
    %16 = vector.shape_cast %15 : vector<1x1x128xf32> to vector<1x128xf32>
    %17 = vector.broadcast %16 : vector<1x128xf32> to vector<2x128xf32>
    %18 = arith.addf %14, %17 : vector<2x128xf32>
    %cst_14 = arith.constant 0.000000e+00 : f32
    %19 = vector.broadcast %cst_14 : f32 to vector<2x128xf32>
    %20 = arith.maximumf %18, %19 : vector<2x128xf32>
    %21 = vector.extract_strided_slice %20 {offsets = [0, 0], sizes = [2, 32], strides = [1, 1]} : vector<2x128xf32> to vector<2x32xf32>
    %c2 = arith.constant 2 : index
    %c0_15 = arith.constant 0 : index
    %c0_16 = arith.constant 0 : index
    %22 = vector.load %arg2[%c2, %c0_15, %c0_16] : memref<3x32x128xf32, #tpu.memory_space<vmem>>, vector<1x32x128xf32>
    %23 = vector.shape_cast %22 : vector<1x32x128xf32> to vector<32x128xf32>
    %cst_17 = arith.constant dense<0.000000e+00> : vector<2x128xf32>
    %24 = tpu.matmul %21, %23, %cst_17 {dimension_numbers = #tpu.dot_dimension_numbers<[1], [0], [0], [1], [0, 0, 1, 1], [], []>} : vector<2x32xf32>, vector<32x128xf32>, vector<2x128xf32> -> vector<2x128xf32>
    %c2_18 = arith.constant 2 : index
    %c0_19 = arith.constant 0 : index
    %c0_20 = arith.constant 0 : index
    %25 = vector.load %arg3[%c2_18, %c0_19, %c0_20] : memref<3x1x128xf32, #tpu.memory_space<vmem>>, vector<1x1x128xf32>
    %26 = vector.shape_cast %25 : vector<1x1x128xf32> to vector<1x128xf32>
    %27 = vector.broadcast %26 : vector<1x128xf32> to vector<2x128xf32>
    %28 = arith.addf %24, %27 : vector<2x128xf32>
    %29 = vector.extract_strided_slice %28 {offsets = [0, 0], sizes = [2, 4], strides = [1, 1]} : vector<2x128xf32> to vector<2x4xf32>
    %c0_21 = arith.constant 0 : index
    %c0_22 = arith.constant 0 : index
    %30 = vector.load %arg4[%c0_21, %c0_22] : memref<2x4xf32, #tpu.memory_space<vmem>>, vector<2x4xf32>
    tpu.vector_store %arg4[%c0_21, %c0_22], %29 {strides = array<i32>} : memref<2x4xf32, #tpu.memory_space<vmem>>, vector<2x4xf32>,
    return
  }
  func.func @transform_0(%arg0: i32) -> (i32, i32) {
    %c0_i32 = arith.constant 0 : i32
    %c0_i32_0 = arith.constant 0 : i32
    return %arg0, %c0_i32 : i32, i32
  }
  func.func @transform_1(%arg0: i32) -> (i32, i32, i32) {
    %c0_i32 = arith.constant 0 : i32
    %c0_i32_0 = arith.constant 0 : i32
    %c0_i32_1 = arith.constant 0 : i32
    %c0_i32_2 = arith.constant 0 : i32
    return %c0_i32, %c0_i32_0, %c0_i32_1 : i32, i32, i32
  }
  func.func @transform_2(%arg0: i32) -> (i32, i32, i32) {
    %c0_i32 = arith.constant 0 : i32
    %c0_i32_0 = arith.constant 0 : i32
    %c0_i32_1 = arith.constant 0 : i32
    %c0_i32_2 = arith.constant 0 : i32
    return %c0_i32, %c0_i32_0, %c0_i32_1 : i32, i32, i32
  }
  func.func @transform_3(%arg0: i32) -> (i32, i32) {
    %c0_i32 = arith.constant 0 : i32
    %c0_i32_0 = arith.constant 0 : i32
    return %arg0, %c0_i32 : i32, i32
  }
}

</mosaic_0001>

<llo_original>
// kernel: dqn_forward.1
$region0: #{dqn_forward.1}
  #allocation0 [shape = 'u32[]', space=smem, size = 0x4, offset = 0x4, fixed_abs, tag = 'smem constant byte address 0x4 - core index']
  #allocation1 [shape = 'u32[144,128]{1,0:T(1,128)}', space=vmem, size = 0x12000, scoped, tag = 'internal scratch']
  %s0 = inlined_call_operand.hbm [shape: f32[2,8], index: 0, kind: input, shape index: {}]
  %s1 = inlined_call_operand.hbm [shape: f32[3,32,128], index: 1, kind: input, shape index: {}]
  %s2 = inlined_call_operand.vmem [shape: f32[3,1,128], index: 2, kind: input, shape index: {}]
  %s3 = inlined_call_operand.hbm [shape: f32[2,4], index: 3, kind: output, shape index: {}]
  %s4 = sld [smem:[#allocation0]]
  $region30: #{dqn_forward.1} parent=0
    _
  %s6 = ssub.s32 1, %s4
  %s7 = scalar_select 0, %s6, %s4
  $region1: #{dqn_forward.1} parent=0
    #allocation2 [shape = 'u8[1024]{0}', space=vmem, size = 0x400, scoped, tag = 'input window, operand 0, single buffered']
    #allocation3 [shape = 's32[1]{0}', space=sflag, size = 0x4, scoped, tag = 'scoped memory for dqn_forward.1']
    #allocation4 [shape = 's32[1]{0}', space=sflag, size = 0x4, scoped, tag = 'scoped memory for dqn_forward.1']
    #allocation5 [shape = 'u8[49152]{0}', space=vmem, size = 0xc000, scoped, tag = 'input window, operand 1, single buffered']
    #allocation6 [shape = 's32[1]{0}', space=sflag, size = 0x4, scoped, tag = 'scoped memory for dqn_forward.1']
    #allocation7 [shape = 'u8[1024]{0}', space=vmem, size = 0x400, scoped, tag = 'output window, operand 0, single buffered']
    %8 = vsyncpa [#allocation3], 0
    %9 = vsyncpa [#allocation6], 0
    %10 = vsyncpa [#allocation4], 0
    // Predicated region
    $region2: #{dqn_forward.1} parent=1 // pred_check
      _
    $region3: #{dqn_forward.1} parent=1 // pred_check_branch
      %12 = sbr.rel (0) target = $region5
    $region4: #{dqn_forward.1} parent=1 // pred_region
      %s14 = ssub.s32 32, 32
      %15 = vsyncadd [#allocation3], %s14
      %s17 = sshll.u32 [#allocation2], 4
      %s18 = int_to_ptr.vmem [resolvable:$true] %s17
      %20 = dma.hbm_to_vmem [thread:$0]  %s0, 32, %s18, [#allocation3]
    $region5: #{dqn_forward.1} parent=1 // pred_fallthru
      _
    // Predicated region
    $region6: #{dqn_forward.1} parent=1 // pred_check
      _
    $region7: #{dqn_forward.1} parent=1 // pred_check_branch
      %22 = sbr.rel (0) target = $region9
    $region8: #{dqn_forward.1} parent=1 // pred_region
      %s24 = ssub.s32 1536, 1536
      %25 = vsyncadd [#allocation6], %s24
      %s26 = sshll.u32 [#allocation5], 4
      %s27 = int_to_ptr.vmem [resolvable:$true] %s26
      %32 = dma.hbm_to_vmem [thread:$0]  %s1, 1536, %s27, [#allocation6], 128, 128, 8
    $region9: #{dqn_forward.1} parent=1 // pred_fallthru
      _
    // Predicated region
    $region10: #{dqn_forward.1} parent=1 // pred_check
      _
    $region11: #{dqn_forward.1} parent=1 // pred_check_branch
      %34 = sbr.rel (0) target = $region13
    $region12: #{dqn_forward.1} parent=1 // pred_region
      _
    $region13: #{dqn_forward.1} parent=1 // pred_fallthru
      _
    // Predicated region
    $region14: #{dqn_forward.1} parent=1 // pred_check
      _
    $region15: #{dqn_forward.1} parent=1 // pred_check_branch
      %36 = sbr.rel (0) target = $region17
    $region16: #{dqn_forward.1} parent=1 // pred_region
      %37 = dma.done [#allocation3], 32
    $region17: #{dqn_forward.1} parent=1 // pred_fallthru
      _
    // Predicated region
    $region18: #{dqn_forward.1} parent=1 // pred_check
      _
    $region19: #{dqn_forward.1} parent=1 // pred_check_branch
      %39 = sbr.rel (0) target = $region21
    $region20: #{dqn_forward.1} parent=1 // pred_region
      %40 = dma.done [#allocation6], 1536
    $region21: #{dqn_forward.1} parent=1 // pred_fallthru
      _
    %v41 = vld [vmem:[#allocation2] sm:$0x3]
    %v42 = vld [vmem:[#allocation5] sm:$0xff]
    %v43 = vld [vmem:[%s2] sm:$0x1]
    %v45 = vlaneseq
    %v46 = vshrl.u32 %v45, 7
    %v47 = vsub.s32 0, %v46
    %v48 = vrot.slane %v43, %v47
    %vm50 = vcmask 64512
    %v52 = vsel %vm50, %v41, 0
    %54 = vmatprep.subr.mxu0 0.0
    %55 = vmatpush1.msra.mxu0 %v42
    %56 = vmatprep.subr.mxu0 0.0
    %57 = vmatpush1.msra.mxu0 0.0
    %58 = vmatprep.subr.mxu0 0.0
    %59 = vmatpush1.msra.mxu0 0.0
    %60 = vmatprep.subr.mxu0 0.0
    %61 = vmatpush1.msra.mxu0 0.0
    %62 = vmatprep.subr.mxu0 0.0
    %63 = vmatpush1.msra.mxu0 0.0
    %64 = vmatprep.subr.mxu0 0.0
    %65 = vmatpush1.msra.mxu0 0.0
    %66 = vmatprep.subr.mxu0 0.0
    %67 = vmatpush1.msra.mxu0 0.0
    %68 = vmatprep.subr.mxu0 0.0
    %69 = vmatpush1.msra.mxu0 0.0
    %70 = vmatprep.subr.mxu0 0.0
    %71 = vmatpush1.msra.mxu0 0.0
    %72 = vmatprep.subr.mxu0 0.0
    %73 = vmatpush1.msra.mxu0 0.0
    %74 = vmatprep.subr.mxu0 0.0
    %75 = vmatpush1.msra.mxu0 0.0
    %76 = vmatprep.subr.mxu0 0.0
    %77 = vmatpush1.msra.mxu0 0.0
    %78 = vmatprep.subr.mxu0 0.0
    %79 = vmatpush1.msra.mxu0 0.0
    %80 = vmatprep.subr.mxu0 0.0
    %81 = vmatpush1.msra.mxu0 0.0
    %82 = vmatprep.subr.mxu0 0.0
    %83 = vmatpush1.msra.mxu0 0.0
    %84 = vmatprep.subr.mxu0 0.0
    %85 = vmatpush1.msra.mxu0 0.0
    %86 = vmatprep.subr.mxu0 0.0
    %87 = vmatpush1.msra.mxu0 0.0
    %88 = vmatprep.subr.mxu0 0.0
    %89 = vmatpush1.msra.mxu0 0.0
    %90 = vmatprep.subr.mxu0 0.0
    %91 = vmatpush1.msra.mxu0 0.0
    %92 = vmatprep.subr.mxu0 0.0
    %93 = vmatpush1.msra.mxu0 0.0
    %94 = vmatprep.subr.mxu0 0.0
    %95 = vmatpush1.msra.mxu0 0.0
    %96 = vmatprep.subr.mxu0 0.0
    %97 = vmatpush1.msra.mxu0 0.0
    %98 = vmatprep.subr.mxu0 0.0
    %99 = vmatpush1.msra.mxu0 0.0
    %100 = vmatprep.subr.mxu0 0.0
    %101 = vmatpush1.msra.mxu0 0.0
    %102 = vmatprep.subr.mxu0 0.0
    %103 = vmatpush1.msra.mxu0 0.0
    %104 = vmatprep.subr.mxu0 0.0
    %105 = vmatpush1.msra.mxu0 0.0
    %106 = vmatprep.subr.mxu0 0.0
    %107 = vmatpush1.msra.mxu0 0.0
    %108 = vmatprep.subr.mxu0 0.0
    %109 = vmatpush1.msra.mxu0 0.0
    %110 = vmatprep.subr.mxu0 0.0
    %111 = vmatpush1.msra.mxu0 0.0
    %112 = vmatprep.subr.mxu0 0.0
    %113 = vmatpush1.msra.mxu0 0.0
    %114 = vmatprep.subr.mxu0 0.0
    %115 = vmatpush1.msra.mxu0 0.0
    %116 = vmatprep.subr.mxu0 0.0
    %117 = vmatpush1.msra.mxu0 0.0
    %118 = vmatprep.mubr.f32.mxu0 0.0
    %119 = vmatmul.mubr.f32.gmra.mrb[0].mxu0 %v52
    %v120 = vpop.f32.mrb[0].mxu0
    %v121 = vadd.f32 %v48, %v120
    %v122 = vpop.f32.mrb[0].mxu0
    %123 = vdwg.mxu0
    %v124 = vmax.f32 %v121, 0.0
    %s125 = scalar_lea.vmem [#allocation5], 32
    %v126 = vld [vmem:[%s125] sm:$0xff]
    %v127 = vld [vmem:[%s125 + $0x8] sm:$0xff]
    %v128 = vld [vmem:[%s125 + $0x10] sm:$0xff]
    %v129 = vld [vmem:[%s125 + $0x18] sm:$0xff]
    %s130 = scalar_lea.vmem %s2, 1
    %v131 = vld [vmem:[%s130] sm:$0x1]
    %v133 = vlaneseq
    %v134 = vshrl.u32 %v133, 7
    %v135 = vsub.s32 0, %v134
    %v136 = vrot.slane %v131, %v135
    %vm138 = vcmask 261120
    %v140 = vsel %vm138, %v124, 0
    %142 = vmatprep.subr.mxu0 0.0
    %143 = vmatpush1.msra.mxu0 %v126
    %144 = vmatprep.subr.mxu0 0.0
    %145 = vmatpush1.msra.mxu0 %v127
    %146 = vmatprep.subr.mxu0 0.0
    %147 = vmatpush1.msra.mxu0 %v128
    %148 = vmatprep.subr.mxu0 0.0
    %149 = vmatpush1.msra.mxu0 %v129
    %150 = vmatprep.subr.mxu0 0.0
    %151 = vmatpush1.msra.mxu0 0.0
    %152 = vmatprep.subr.mxu0 0.0
    %153 = vmatpush1.msra.mxu0 0.0
    %154 = vmatprep.subr.mxu0 0.0
    %155 = vmatpush1.msra.mxu0 0.0
    %156 = vmatprep.subr.mxu0 0.0
    %157 = vmatpush1.msra.mxu0 0.0
    %158 = vmatprep.subr.mxu0 0.0
    %159 = vmatpush1.msra.mxu0 0.0
    %160 = vmatprep.subr.mxu0 0.0
    %161 = vmatpush1.msra.mxu0 0.0
    %162 = vmatprep.subr.mxu0 0.0
    %163 = vmatpush1.msra.mxu0 0.0
    %164 = vmatprep.subr.mxu0 0.0
    %165 = vmatpush1.msra.mxu0 0.0
    %166 = vmatprep.subr.mxu0 0.0
    %167 = vmatpush1.msra.mxu0 0.0
    %168 = vmatprep.subr.mxu0 0.0
    %169 = vmatpush1.msra.mxu0 0.0
    %170 = vmatprep.subr.mxu0 0.0
    %171 = vmatpush1.msra.mxu0 0.0
    %172 = vmatprep.subr.mxu0 0.0
    %173 = vmatpush1.msra.mxu0 0.0
    %174 = vmatprep.subr.mxu0 0.0
    %175 = vmatpush1.msra.mxu0 0.0
    %176 = vmatprep.subr.mxu0 0.0
    %177 = vmatpush1.msra.mxu0 0.0
    %178 = vmatprep.subr.mxu0 0.0
    %179 = vmatpush1.msra.mxu0 0.0
    %180 = vmatprep.subr.mxu0 0.0
    %181 = vmatpush1.msra.mxu0 0.0
    %182 = vmatprep.subr.mxu0 0.0
    %183 = vmatpush1.msra.mxu0 0.0
    %184 = vmatprep.subr.mxu0 0.0
    %185 = vmatpush1.msra.mxu0 0.0
    %186 = vmatprep.subr.mxu0 0.0
    %187 = vmatpush1.msra.mxu0 0.0
    %188 = vmatprep.subr.mxu0 0.0
    %189 = vmatpush1.msra.mxu0 0.0
    %190 = vmatprep.subr.mxu0 0.0
    %191 = vmatpush1.msra.mxu0 0.0
    %192 = vmatprep.subr.mxu0 0.0
    %193 = vmatpush1.msra.mxu0 0.0
    %194 = vmatprep.subr.mxu0 0.0
    %195 = vmatpush1.msra.mxu0 0.0
    %196 = vmatprep.subr.mxu0 0.0
    %197 = vmatpush1.msra.mxu0 0.0
    %198 = vmatprep.subr.mxu0 0.0
    %199 = vmatpush1.msra.mxu0 0.0
    %200 = vmatprep.subr.mxu0 0.0
    %201 = vmatpush1.msra.mxu0 0.0
    %202 = vmatprep.subr.mxu0 0.0
    %203 = vmatpush1.msra.mxu0 0.0
    %204 = vmatprep.subr.mxu0 0.0
    %205 = vmatpush1.msra.mxu0 0.0
    %206 = vmatprep.mubr.f32.mxu0 0.0
    %207 = vmatmul.mubr.f32.gmra.mrb[0].mxu0 %v140
    %v208 = vpop.f32.mrb[0].mxu0
    %v209 = vadd.f32 %v136, %v208
    %v210 = vpop.f32.mrb[0].mxu0
    %211 = vdwg.mxu0
    %v212 = vmax.f32 %v209, 0.0
    %s213 = scalar_lea.vmem [#allocation5], 64
    %v214 = vld [vmem:[%s213] sm:$0xff]
    %v215 = vld [vmem:[%s213 + $0x8] sm:$0xff]
    %v216 = vld [vmem:[%s213 + $0x10] sm:$0xff]
    %v217 = vld [vmem:[%s213 + $0x18] sm:$0xff]
    %s218 = scalar_lea.vmem %s2, 2
    %v219 = vld [vmem:[%s218] sm:$0x1]
    %v221 = vlaneseq
    %v222 = vshrl.u32 %v221, 7
    %v223 = vsub.s32 0, %v222
    %v224 = vrot.slane %v219, %v223
    %v227 = vsel %vm138, %v212, 0
    %229 = vmatprep.subr.mxu0 0.0
    %230 = vmatpush1.msra.mxu0 %v214
    %231 = vmatprep.subr.mxu0 0.0
    %232 = vmatpush1.msra.mxu0 %v215
    %233 = vmatprep.subr.mxu0 0.0
    %234 = vmatpush1.msra.mxu0 %v216
    %235 = vmatprep.subr.mxu0 0.0
    %236 = vmatpush1.msra.mxu0 %v217
    %237 = vmatprep.subr.mxu0 0.0
    %238 = vmatpush1.msra.mxu0 0.0
    %239 = vmatprep.subr.mxu0 0.0
    %240 = vmatpush1.msra.mxu0 0.0
    %241 = vmatprep.subr.mxu0 0.0
    %242 = vmatpush1.msra.mxu0 0.0
    %243 = vmatprep.subr.mxu0 0.0
    %244 = vmatpush1.msra.mxu0 0.0
    %245 = vmatprep.subr.mxu0 0.0
    %246 = vmatpush1.msra.mxu0 0.0
    %247 = vmatprep.subr.mxu0 0.0
    %248 = vmatpush1.msra.mxu0 0.0
    %249 = vmatprep.subr.mxu0 0.0
    %250 = vmatpush1.msra.mxu0 0.0
    %251 = vmatprep.subr.mxu0 0.0
    %252 = vmatpush1.msra.mxu0 0.0
    %253 = vmatprep.subr.mxu0 0.0
    %254 = vmatpush1.msra.mxu0 0.0
    %255 = vmatprep.subr.mxu0 0.0
    %256 = vmatpush1.msra.mxu0 0.0
    %257 = vmatprep.subr.mxu0 0.0
    %258 = vmatpush1.msra.mxu0 0.0
    %259 = vmatprep.subr.mxu0 0.0
    %260 = vmatpush1.msra.mxu0 0.0
    %261 = vmatprep.subr.mxu0 0.0
    %262 = vmatpush1.msra.mxu0 0.0
    %263 = vmatprep.subr.mxu0 0.0
    %264 = vmatpush1.msra.mxu0 0.0
    %265 = vmatprep.subr.mxu0 0.0
    %266 = vmatpush1.msra.mxu0 0.0
    %267 = vmatprep.subr.mxu0 0.0
    %268 = vmatpush1.msra.mxu0 0.0
    %269 = vmatprep.subr.mxu0 0.0
    %270 = vmatpush1.msra.mxu0 0.0
    %271 = vmatprep.subr.mxu0 0.0
    %272 = vmatpush1.msra.mxu0 0.0
    %273 = vmatprep.subr.mxu0 0.0
    %274 = vmatpush1.msra.mxu0 0.0
    %275 = vmatprep.subr.mxu0 0.0
    %276 = vmatpush1.msra.mxu0 0.0
    %277 = vmatprep.subr.mxu0 0.0
    %278 = vmatpush1.msra.mxu0 0.0
    %279 = vmatprep.subr.mxu0 0.0
    %280 = vmatpush1.msra.mxu0 0.0
    %281 = vmatprep.subr.mxu0 0.0
    %282 = vmatpush1.msra.mxu0 0.0
    %283 = vmatprep.subr.mxu0 0.0
    %284 = vmatpush1.msra.mxu0 0.0
    %285 = vmatprep.subr.mxu0 0.0
    %286 = vmatpush1.msra.mxu0 0.0
    %287 = vmatprep.subr.mxu0 0.0
    %288 = vmatpush1.msra.mxu0 0.0
    %289 = vmatprep.subr.mxu0 0.0
    %290 = vmatpush1.msra.mxu0 0.0
    %291 = vmatprep.subr.mxu0 0.0
    %292 = vmatpush1.msra.mxu0 0.0
    %293 = vmatprep.mubr.f32.mxu0 0.0
    %294 = vmatmul.mubr.f32.gmra.mrb[0].mxu0 %v227
    %v295 = vpop.f32.mrb[0].mxu0
    %v296 = vadd.f32 %v224, %v295
    %v297 = vpop.f32.mrb[0].mxu0
    %298 = vdwg.mxu0
    %vm299 = vcmask 25600
    %300 = vst.msk [vmem:[#allocation7] sm:$0x3] %vm299, %v296
    // Predicated region
    $region22: #{dqn_forward.1} parent=1 // pred_check
      _
    $region23: #{dqn_forward.1} parent=1 // pred_check_branch
      %302 = sbr.rel (0) target = $region25
    $region24: #{dqn_forward.1} parent=1 // pred_region
      %s304 = ssub.s32 32, 32
      %305 = vsyncadd [#allocation4], %s304
      %s307 = sshll.u32 [#allocation7], 4
      %s308 = int_to_ptr.vmem [resolvable:$true] %s307
      %310 = dma.vmem_to_hbm [thread:$0]  %s308, 32, %s3, [#allocation4]
    $region25: #{dqn_forward.1} parent=1 // pred_fallthru
      _
    // Predicated region
    $region26: #{dqn_forward.1} parent=1 // pred_check
      _
    $region27: #{dqn_forward.1} parent=1 // pred_check_branch
      %312 = sbr.rel (0) target = $region29
    $region28: #{dqn_forward.1} parent=1 // pred_region
      %313 = dma.done [#allocation4], 32
    $region29: #{dqn_forward.1} parent=1 // pred_fallthru
      _
    %314 = vsyncpa [#allocation3], 1
    %315 = vsyncpa [#allocation6], 1
    %316 = vsyncpa [#allocation4], 1

</llo_original>
